<compile_context>
chip_gen: v7x
topology: tpu7x:2x2x1
jax: 0.10.0
libtpu: 0.0.40
codegen_flags: <defaults>
</compile_context>

<pallas_src>
import jax
import jax.numpy as jnp
from jax.experimental import pallas as pl
from jax.experimental.pallas import tpu as pltpu


# ---------------------------------------------------------------------------
# Pass 1: conv (one lane-dense matmul per row tile) + per-lane sum / sumsq.
# ---------------------------------------------------------------------------
def _conv_stats_kernel(lhs_ref, w_ref, y_ref, sum_ref, sq_ref):
    """lhs_ref: (TM, KWC); w_ref: (KWC, WCO); y_ref: (TM, WCO);
    sum_ref/sq_ref: (1, WCO) resident accumulators (constant block index)."""
    @pl.when(pl.program_id(0) == 0)
    def _init():
        sum_ref[...] = jnp.zeros_like(sum_ref)
        sq_ref[...] = jnp.zeros_like(sq_ref)

    y = jnp.dot(lhs_ref[...], w_ref[...], preferred_element_type=jnp.float32)
    y_ref[...] = y
    # One-pass stats while the tile is still in vregs (E[x], E[x^2]).
    sum_ref[...] += jnp.sum(y, axis=0, keepdims=True)
    sq_ref[...] += jnp.sum(y * y, axis=0, keepdims=True)


# ---------------------------------------------------------------------------
# Pass 2: fused BatchNorm (pre-folded scale/shift) + ReLU, lane-dense store.
# ---------------------------------------------------------------------------
def _bn_relu_kernel(y_ref, scale_ref, shift_ref, o_ref):
    o_ref[...] = jnp.maximum(y_ref[...] * scale_ref[...] + shift_ref[...], 0.0)


def bottleneck_forward(x_nchw, weight, bias, gamma, beta, *, eps=1e-5,
                       block_rows=None):
    """x_nchw: (N, C_in, H, W); weight: (C_out, C_in, K, K) (PyTorch layout)."""
    f32 = jnp.float32
    N, C_in, H, W = x_nchw.shape
    C_out, C_in_w, K, K2 = weight.shape
    assert C_in_w == C_in and K == K2 and K % 2 == 1, "odd 'same' kernels only"
    pad = K // 2
    Hp, Wp = H + 2 * pad, W + 2 * pad

    Mr = N * H                 # rows of the lane-dense layout
    KWC = K * Wp * C_in        # contraction depth of the single matmul
    WCO = W * C_out            # lane-dense output width (128 for the test shape)

    # --- wrapper-side layout work (XLA): NCHW -> NHWC, pad, row-wise im2col ----
    x = jnp.transpose(x_nchw, (0, 2, 3, 1)).astype(f32)
    x = jnp.pad(x, ((0, 0), (pad, pad), (pad, pad), (0, 0)))
    rows = x.reshape(N, Hp, Wp * C_in)
    # lhs[(n,h), kh*Wp*C_in + wp*C_in + ci] = x_pad[n, h+kh, wp, ci]
    lhs = jnp.concatenate([rows[:, kh:kh + H, :] for kh in range(K)], axis=-1)
    lhs = lhs.reshape(Mr, KWC)

    # --- Toeplitz-expanded weights: (KWC, W*C_out), built once ----------------
    # w_big[kh*Wp*C_in + wp*C_in + ci, w*C_out + co] = weight[co,ci,kh,wp-w]
    #   if 0 <= wp - w < K else 0.
    wt = jnp.transpose(weight, (2, 3, 1, 0)).astype(f32)   # (K, K, C_in, C_out)
    w_big = jnp.zeros((K, Wp, C_in, W, C_out), f32)
    for kw in range(K):
        sel = jnp.eye(Wp, W, k=-kw, dtype=f32)              # sel[wp,w] = (wp == w+kw)
        w_big = w_big + sel[None, :, None, :, None] * wt[:, kw][:, None, :, None, :]
    w_big = w_big.reshape(KWC, WCO)

    # Conv bias cancels exactly under train-mode BatchNorm (dead work) -> drop it.
    del bias

    if block_rows is None:
        block_rows = min(Mr, 128)
    assert Mr % block_rows == 0, "block_rows must divide N*H"
    grid = Mr // block_rows

    # ---------------- pass 1: conv + partial stats ----------------------------
    conv2d, psum, psq = pl.pallas_call(
        _conv_stats_kernel,
        out_shape=(jax.ShapeDtypeStruct((Mr, WCO), f32),
                   jax.ShapeDtypeStruct((1, WCO), f32),
                   jax.ShapeDtypeStruct((1, WCO), f32)),
        grid=(grid,),
        in_specs=[
            pl.BlockSpec((block_rows, KWC), lambda i: (i, 0)),
            pl.BlockSpec((KWC, WCO), lambda i: (0, 0)),       # weights resident
        ],
        out_specs=(
            pl.BlockSpec((block_rows, WCO), lambda i: (i, 0)),
            pl.BlockSpec((1, WCO), lambda i: (0, 0)),          # resident accumulator
            pl.BlockSpec((1, WCO), lambda i: (0, 0)),          # resident accumulator
        ),
        compiler_params=pltpu.CompilerParams(
            dimension_semantics=("arbitrary",)),               # stats reduce over grid
    )(lhs, w_big)

    # --- fold BN into one per-lane scale/shift (tiny XLA math) ----------------
    cnt = jnp.float32(N * H * W)
    ch_sum = psum.reshape(W, C_out).sum(axis=0)                # lane = w*C_out + co
    ch_sq = psq.reshape(W, C_out).sum(axis=0)
    mean = ch_sum / cnt
    var = jnp.maximum(ch_sq / cnt - mean * mean, 0.0)          # biased (train-mode) var
    inv = jax.lax.rsqrt(var + eps)
    scale_c = gamma.astype(f32) * inv
    shift_c = beta.astype(f32) - mean * scale_c
    scale = jnp.tile(scale_c, W).reshape(1, WCO)
    shift = jnp.tile(shift_c, W).reshape(1, WCO)

    # ---------------- pass 2: normalize + ReLU writeback ----------------------
    out2d = pl.pallas_call(
        _bn_relu_kernel,
        out_shape=jax.ShapeDtypeStruct((Mr, WCO), f32),
        grid=(grid,),
        in_specs=[
            pl.BlockSpec((block_rows, WCO), lambda i: (i, 0)),
            pl.BlockSpec((1, WCO), lambda i: (0, 0)),
            pl.BlockSpec((1, WCO), lambda i: (0, 0)),
        ],
        out_specs=pl.BlockSpec((block_rows, WCO), lambda i: (i, 0)),
        compiler_params=pltpu.CompilerParams(
            dimension_semantics=("parallel",)),                # megacore-splittable
    )(conv2d, scale, shift)

    # (N*H, W*C_out) -> (N, H, W, C_out) -> NCHW, once, wrapper-side.
    return out2d.reshape(N, H, W, C_out).transpose(0, 3, 1, 2)


def _reference(x_nchw, weight, bias, gamma, beta, eps=1e-5):
    """Pure-JAX reference (conv + train-mode BN + ReLU) for validation."""
    y = jax.lax.conv_general_dilated(
        x_nchw.astype(jnp.float32), weight.astype(jnp.float32),
        window_strides=(1, 1), padding="SAME",
        dimension_numbers=("NCHW", "OIHW", "NCHW"))
    y = y + bias.reshape(1, -1, 1, 1)
    mean = jnp.mean(y, axis=(0, 2, 3), keepdims=True)
    var = jnp.mean((y - mean) ** 2, axis=(0, 2, 3), keepdims=True)
    y = (y - mean) * jax.lax.rsqrt(var + eps)
    y = y * gamma.reshape(1, -1, 1, 1) + beta.reshape(1, -1, 1, 1)
    return jnp.maximum(y, 0.0)


if __name__ == "__main__":
    # Bottleneck(in_channels=4, out_channels=8, kernel=3) at small spatial size.
    N, C_in, H, W = 2, 4, 16, 16
    C_out, K = 8, 3

    key = jax.random.PRNGKey(0)
    kx, kw, kb = jax.random.split(key, 3)

    x = jax.random.normal(kx, (N, C_in, H, W), dtype=jnp.float32)

    # Conv2d-style init (U(-bound, bound)); BN: gamma=1, beta=0.
    fan_in = C_in * K * K
    bound = 1.0 / (fan_in ** 0.5)
    weight = jax.random.uniform(kw, (C_out, C_in, K, K), jnp.float32, -bound, bound)
    bias = jax.random.uniform(kb, (C_out,), jnp.float32, -bound, bound)
    gamma = jnp.ones((C_out,), jnp.float32)
    beta = jnp.zeros((C_out,), jnp.float32)

    # block_rows=8 -> 4 grid steps per pass: exercises real pipelining.
    out = bottleneck_forward(x, weight, bias, gamma, beta, block_rows=8)
    out = jax.block_until_ready(out)

    ref = _reference(x, weight, bias, gamma, beta)
    assert out.shape == (N, C_out, H, W), out.shape
    assert jnp.allclose(out, ref, atol=2e-3, rtol=2e-3), \
        float(jnp.max(jnp.abs(out - ref)))

    print("KERNEL_OK")
</pallas_src>

<mosaic_0001>
module attributes {stable_mosaic.version = 11 : i64} {
  func.func @_conv_stats_kernel(%arg0: i32, %arg1: memref<8x216xf32, #tpu.memory_space<vmem>>, %arg2: memref<216x128xf32, #tpu.memory_space<vmem>>, %arg3: memref<8x128xf32, #tpu.memory_space<vmem>>, %arg4: memref<1x128xf32, #tpu.memory_space<vmem>>, %arg5: memref<1x128xf32, #tpu.memory_space<vmem>>) attributes {dimension_semantics = [#tpu.dimension_semantics<arbitrary>], iteration_bounds = array<i64: 4>, scalar_prefetch = 0 : i64, scratch_operands = 0 : i64, tpu.core_type = #tpu.core_type<tc>, window_params = [{transform_indices = @transform_0, window_bounds = array<i64: 8, 216>}, {pipeline_mode = #tpu.pipeline_mode<synchronous>, transform_indices = @transform_1, window_bounds = array<i64: 216, 128>}, {transform_indices = @transform_2, window_bounds = array<i64: 8, 128>}, {pipeline_mode = #tpu.pipeline_mode<synchronous>, transform_indices = @transform_3, window_bounds = array<i64: 1, 128>}, {pipeline_mode = #tpu.pipeline_mode<synchronous>, transform_indices = @transform_4, window_bounds = array<i64: 1, 128>}]} {
    %c0_i32 = arith.constant 0 : i32
    %0 = arith.cmpi eq, %arg0, %c0_i32 : i32
    %1 = arith.extui %0 : i1 to i32
    %c0_i32_0 = arith.constant 0 : i32
    %2 = arith.cmpi ne, %1, %c0_i32_0 : i32
    scf.if %2 {
      %cst_16 = arith.constant 0.000000e+00 : f32
      %18 = vector.broadcast %cst_16 : f32 to vector<1x128xf32>
      %c0_17 = arith.constant 0 : index
      %c0_18 = arith.constant 0 : index
      %19 = vector.load %arg4[%c0_17, %c0_18] : memref<1x128xf32, #tpu.memory_space<vmem>>, vector<1x128xf32>
      tpu.vector_store %arg4[%c0_17, %c0_18], %18 {strides = array<i32>} : memref<1x128xf32, #tpu.memory_space<vmem>>, vector<1x128xf32>,
      %cst_19 = arith.constant 0.000000e+00 : f32
      %20 = vector.broadcast %cst_19 : f32 to vector<1x128xf32>
      %c0_20 = arith.constant 0 : index
      %c0_21 = arith.constant 0 : index
      %21 = vector.load %arg5[%c0_20, %c0_21] : memref<1x128xf32, #tpu.memory_space<vmem>>, vector<1x128xf32>
      tpu.vector_store %arg5[%c0_20, %c0_21], %20 {strides = array<i32>} : memref<1x128xf32, #tpu.memory_space<vmem>>, vector<1x128xf32>,
    } else {
    }
    %c0 = arith.constant 0 : index
    %c0_1 = arith.constant 0 : index
    %3 = vector.load %arg1[%c0, %c0_1] : memref<8x216xf32, #tpu.memory_space<vmem>>, vector<8x216xf32>
    %c0_2 = arith.constant 0 : index
    %c0_3 = arith.constant 0 : index
    %4 = vector.load %arg2[%c0_2, %c0_3] : memref<216x128xf32, #tpu.memory_space<vmem>>, vector<216x128xf32>
    %cst = arith.constant dense<0.000000e+00> : vector<8x128xf32>
    %5 = tpu.matmul %3, %4, %cst {dimension_numbers = #tpu.dot_dimension_numbers<[1], [0], [0], [1], [0, 0, 1, 1], [], []>} : vector<8x216xf32>, vector<216x128xf32>, vector<8x128xf32> -> vector<8x128xf32>
    %c0_4 = arith.constant 0 : index
    %c0_5 = arith.constant 0 : index
    %6 = vector.load %arg3[%c0_4, %c0_5] : memref<8x128xf32, #tpu.memory_space<vmem>>, vector<8x128xf32>
    tpu.vector_store %arg3[%c0_4, %c0_5], %5 {strides = array<i32>} : memref<8x128xf32, #tpu.memory_space<vmem>>, vector<8x128xf32>,
    %c0_6 = arith.constant 0 : index
    %c0_7 = arith.constant 0 : index
    %7 = vector.load %arg4[%c0_6, %c0_7] : memref<1x128xf32, #tpu.memory_space<vmem>>, vector<1x128xf32>
    %cst_8 = arith.constant dense<0.000000e+00> : vector<128xf32>
    %8 = vector.multi_reduction <add>, %5, %cst_8 [0] : vector<8x128xf32> to vector<128xf32>
    %9 = vector.shape_cast %8 : vector<128xf32> to vector<1x128xf32>
    %10 = arith.addf %7, %9 : vector<1x128xf32>
    %c0_9 = arith.constant 0 : index
    %c0_10 = arith.constant 0 : index
    %11 = vector.load %arg4[%c0_9, %c0_10] : memref<1x128xf32, #tpu.memory_space<vmem>>, vector<1x128xf32>
    tpu.vector_store %arg4[%c0_9, %c0_10], %10 {strides = array<i32>} : memref<1x128xf32, #tpu.memory_space<vmem>>, vector<1x128xf32>,
    %c0_11 = arith.constant 0 : index
    %c0_12 = arith.constant 0 : index
    %12 = vector.load %arg5[%c0_11, %c0_12] : memref<1x128xf32, #tpu.memory_space<vmem>>, vector<1x128xf32>
    %13 = arith.mulf %5, %5 : vector<8x128xf32>
    %cst_13 = arith.constant dense<0.000000e+00> : vector<128xf32>
    %14 = vector.multi_reduction <add>, %13, %cst_13 [0] : vector<8x128xf32> to vector<128xf32>
    %15 = vector.shape_cast %14 : vector<128xf32> to vector<1x128xf32>
    %16 = arith.addf %12, %15 : vector<1x128xf32>
    %c0_14 = arith.constant 0 : index
    %c0_15 = arith.constant 0 : index
    %17 = vector.load %arg5[%c0_14, %c0_15] : memref<1x128xf32, #tpu.memory_space<vmem>>, vector<1x128xf32>
    tpu.vector_store %arg5[%c0_14, %c0_15], %16 {strides = array<i32>} : memref<1x128xf32, #tpu.memory_space<vmem>>, vector<1x128xf32>,
    return
  }
  func.func @transform_0(%arg0: i32) -> (i32, i32) {
    %c0_i32 = arith.constant 0 : i32
    %c0_i32_0 = arith.constant 0 : i32
    return %arg0, %c0_i32 : i32, i32
  }
  func.func @transform_1(%arg0: i32) -> (i32, i32) {
    %c0_i32 = arith.constant 0 : i32
    %c0_i32_0 = arith.constant 0 : i32
    %c0_i32_1 = arith.constant 0 : i32
    return %c0_i32, %c0_i32_0 : i32, i32
  }
  func.func @transform_2(%arg0: i32) -> (i32, i32) {
    %c0_i32 = arith.constant 0 : i32
    %c0_i32_0 = arith.constant 0 : i32
    return %arg0, %c0_i32 : i32, i32
  }
  func.func @transform_3(%arg0: i32) -> (i32, i32) {
    %c0_i32 = arith.constant 0 : i32
    %c0_i32_0 = arith.constant 0 : i32
    %c0_i32_1 = arith.constant 0 : i32
    return %c0_i32, %c0_i32_0 : i32, i32
  }
  func.func @transform_4(%arg0: i32) -> (i32, i32) {
    %c0_i32 = arith.constant 0 : i32
    %c0_i32_0 = arith.constant 0 : i32
    %c0_i32_1 = arith.constant 0 : i32
    return %c0_i32, %c0_i32_0 : i32, i32
  }
}

</mosaic_0001>

<llo_original>
// kernel: tpu_custom_call.1
$region0: #{tpu_custom_call.1}
  #allocation0 [shape = 'u32[]', space=smem, size = 0x4, offset = 0x4, fixed_abs, tag = 'smem constant byte address 0x4 - core index']
  #allocation1 [shape = 'u32[144,128]{1,0:T(1,128)}', space=vmem, size = 0x12000, scoped, tag = 'internal scratch']
  %s0 = inlined_call_operand.hbm [shape: f32[32,216], index: 0, kind: input, shape index: {}]
  %s1 = inlined_call_operand.hbm [shape: f32[216,128], index: 1, kind: input, shape index: {}]
  %s2 = inlined_call_operand.hbm [shape: f32[32,128], index: 2, kind: output, shape index: {0}]
  %s3 = inlined_call_operand.hbm [shape: f32[1,128], index: 3, kind: output, shape index: {1}]
  %s4 = inlined_call_operand.hbm [shape: f32[1,128], index: 4, kind: output, shape index: {2}]
  %5 = xla_tuple %s2, %s3, %s4
  %s6 = sld [smem:[#allocation0]]
  $region69: #{tpu_custom_call.1} parent=0
    _
  %s8 = ssub.s32 1, %s6
  %s9 = scalar_select 0, %s8, %s6
  $region1: #{tpu_custom_call.1} parent=0
    #allocation2 [shape = 'u8[16384]{0}', space=vmem, size = 0x4000, scoped, tag = 'input window, operand 0']
    #allocation3 [shape = 's32[2]{0}', space=sflag, size = 0x8, scoped, tag = 'scoped memory for tpu_custom_call.1']
    #allocation4 [shape = 's32[2]{0}', space=sflag, size = 0x8, scoped, tag = 'scoped memory for tpu_custom_call.1']
    #allocation5 [shape = 'u8[110592]{0}', space=vmem, size = 0x1b000, scoped, tag = 'input window, operand 1, single buffered']
    #allocation6 [shape = 's32[1]{0}', space=sflag, size = 0x4, scoped, tag = 'scoped memory for tpu_custom_call.1']
    #allocation7 [shape = 'u8[8192]{0}', space=vmem, size = 0x2000, scoped, tag = 'output window, operand 0']
    #allocation8 [shape = 'u8[512]{0}', space=vmem, size = 0x400, scoped, tag = 'output window, operand 1, single buffered']
    #allocation9 [shape = 's32[1]{0}', space=sflag, size = 0x4, scoped, tag = 'scoped memory for tpu_custom_call.1']
    #allocation10 [shape = 'u8[512]{0}', space=vmem, size = 0x400, scoped, tag = 'output window, operand 2, single buffered']
    %10 = vsyncpa [#allocation3], 0
    %s11 = scalar_lea.sflag [#allocation3], 1
    %12 = vsyncpa %s11, 0
    %13 = vsyncpa [#allocation6], 0
    %14 = vsyncpa [#allocation4], 0
    %s15 = scalar_lea.sflag [#allocation4], 1
    %16 = vsyncpa %s15, 0
    %17 = vsyncpa [#allocation9], 0
    loop: start=0, step=1, limit=6
    $region2: #{tpu_custom_call.1} parent=1 // loop_pre_header
      _
    $region3: #{tpu_custom_call.1} parent=1 // loop_header
      %s19 = sphi 0, %s23
      %p20 = scmp.ge.s32.totalorder %s19, 6
      %s29 = sphi 0, %s31
      %s32 = sphi 0, %s29
      %s33 = sphi 0, %s32
      %s49 = sphi 0, %s33
      %s53 = sphi 0, %s53
      %s55 = sphi 0, %s53
      %s56 = sphi 0, %s55
      %s70 = sphi 0, %s56
      %s76 = sphi 0, %s78
      %s79 = sphi 0, %s76
      %s80 = sphi 0, %s79
      %s96 = sphi 0, %s80
      %s100 = sphi 0, %s100
      %s102 = sphi 0, %s100
      %s103 = sphi 0, %s102
      %s117 = sphi 0, %s103
      %s121 = sphi 0, %s121
      %s123 = sphi 0, %s121
      %s124 = sphi 0, %s123
      %s138 = sphi 0, %s124
    $region4: #{tpu_custom_call.1} parent=1 // loop_header_branch
      %22 = sbr.rel (%p20) target = $region8
    $region5: #{tpu_custom_call.1} parent=1 // loop_body
      %s24 = ssub.s32 %s19, 1
      %s25 = ssub.s32 %s19, 2
      %s26 = sadd.s32 %s19, 1
      %s27 = ssub.s32 %s19, %s26
      %p28 = scmp.eq.s32.totalorder %s27, 0
      %s30 = sadd.s32 %s29, 1
      %s31 = scalar_select %p28, %s29, %s30
      %p34 = pneg %p28
      %p35 = scmp.eq.s32.totalorder %s19, 3
      %p36 = por %p34, %p35
      %p37 = scmp.ne.s32.totalorder %s29, %s32
      %p38 = scmp.eq.s32.totalorder %s19, 0
      %p39 = por %p37, %p38
      %p40 = scmp.ne.s32.totalorder %s29, %s32
      %p41 = scmp.eq.s32.totalorder %s24, 3
      %p42 = por %p40, %p41
      %p43 = scmp.ne.s32.totalorder %s32, %s33
      %p44 = scmp.eq.s32.totalorder %s24, 0
      %p45 = por %p43, %p44
      %p46 = scmp.ne.s32.totalorder %s32, %s33
      %p47 = scmp.eq.s32.totalorder %s25, 3
      %p48 = por %p46, %p47
      %p50 = scmp.ne.s32.totalorder %s33, %s49
      %p51 = scmp.eq.s32.totalorder %s25, 0
      %p52 = por %p50, %p51
      %s54 = sadd.s32 %s53, 1
      %p57 = scmp.eq.s32.totalorder %s19, 3
      %p58 = scmp.ne.s32.totalorder %s53, %s55
      %p59 = scmp.eq.s32.totalorder %s19, 0
      %p60 = por %p58, %p59
      %p61 = scmp.ne.s32.totalorder %s53, %s55
      %p62 = scmp.eq.s32.totalorder %s24, 3
      %p63 = por %p61, %p62
      %p64 = scmp.ne.s32.totalorder %s55, %s56
      %p65 = scmp.eq.s32.totalorder %s24, 0
      %p66 = por %p64, %p65
      %p67 = scmp.ne.s32.totalorder %s55, %s56
      %p68 = scmp.eq.s32.totalorder %s25, 3
      %p69 = por %p67, %p68
      %p71 = scmp.ne.s32.totalorder %s56, %s70
      %p72 = scmp.eq.s32.totalorder %s25, 0
      %p73 = por %p71, %p72
      %s74 = ssub.s32 %s19, %s26
      %p75 = scmp.eq.s32.totalorder %s74, 0
      %s77 = sadd.s32 %s76, 1
      %s78 = scalar_select %p75, %s76, %s77
      %p81 = pneg %p75
      %p82 = scmp.eq.s32.totalorder %s19, 3
      %p83 = por %p81, %p82
      %p84 = scmp.ne.s32.totalorder %s76, %s79
      %p85 = scmp.eq.s32.totalorder %s19, 0
      %p86 = por %p84, %p85
      %p87 = scmp.ne.s32.totalorder %s76, %s79
      %p88 = scmp.eq.s32.totalorder %s24, 3
      %p89 = por %p87, %p88
      %p90 = scmp.ne.s32.totalorder %s79, %s80
      %p91 = scmp.eq.s32.totalorder %s24, 0
      %p92 = por %p90, %p91
      %p93 = scmp.ne.s32.totalorder %s79, %s80
      %p94 = scmp.eq.s32.totalorder %s25, 3
      %p95 = por %p93, %p94
      %p97 = scmp.ne.s32.totalorder %s80, %s96
      %p98 = scmp.eq.s32.totalorder %s25, 0
      %p99 = por %p97, %p98
      %s101 = sadd.s32 %s100, 1
      %p104 = scmp.eq.s32.totalorder %s19, 3
      %p105 = scmp.ne.s32.totalorder %s100, %s102
      %p106 = scmp.eq.s32.totalorder %s19, 0
      %p107 = por %p105, %p106
      %p108 = scmp.ne.s32.totalorder %s100, %s102
      %p109 = scmp.eq.s32.totalorder %s24, 3
      %p110 = por %p108, %p109
      %p111 = scmp.ne.s32.totalorder %s102, %s103
      %p112 = scmp.eq.s32.totalorder %s24, 0
      %p113 = por %p111, %p112
      %p114 = scmp.ne.s32.totalorder %s102, %s103
      %p115 = scmp.eq.s32.totalorder %s25, 3
      %p116 = por %p114, %p115
      %p118 = scmp.ne.s32.totalorder %s103, %s117
      %p119 = scmp.eq.s32.totalorder %s25, 0
      %p120 = por %p118, %p119
      %s122 = sadd.s32 %s121, 1
      %p125 = scmp.eq.s32.totalorder %s19, 3
      %p126 = scmp.ne.s32.totalorder %s121, %s123
      %p127 = scmp.eq.s32.totalorder %s19, 0
      %p128 = por %p126, %p127
      %p129 = scmp.ne.s32.totalorder %s121, %s123
      %p130 = scmp.eq.s32.totalorder %s24, 3
      %p131 = por %p129, %p130
      %p132 = scmp.ne.s32.totalorder %s123, %s124
      %p133 = scmp.eq.s32.totalorder %s24, 0
      %p134 = por %p132, %p133
      %p135 = scmp.ne.s32.totalorder %s123, %s124
      %p136 = scmp.eq.s32.totalorder %s25, 3
      %p137 = por %p135, %p136
      %p139 = scmp.ne.s32.totalorder %s124, %s138
      %p140 = scmp.eq.s32.totalorder %s25, 0
      %p141 = por %p139, %p140
      %p142 = scmp.le.s32.totalorder 1, %s19
      %p143 = scmp.lt.s32.totalorder %s19, 5
      %p144 = pnand %p142, %p143
      %p145 = pneg %p144
      // Predicated region
      $region9: #{tpu_custom_call.1} parent=5 // pred_check
        _
      $region10: #{tpu_custom_call.1} parent=5 // pred_check_branch
        %147 = sbr.rel (%p144) target = $region12
      $region11: #{tpu_custom_call.1} parent=5 // pred_region
        %s148 = ssub.s32 %s19, 1
        // Predicated region
        $region13: #{tpu_custom_call.1} parent=11 // pred_check
          %p149 = pneg %p66
        $region14: #{tpu_custom_call.1} parent=11 // pred_check_branch
          %151 = sbr.rel (%p149) target = $region16
        $region15: #{tpu_custom_call.1} parent=11 // pred_region
          %s153 = ssub.s32 3456, 3456
          %154 = vsyncadd [#allocation6], %s153
          %s155 = sshll.u32 [#allocation5], 4
          %s156 = int_to_ptr.vmem [resolvable:$true] %s155
          %161 = dma.hbm_to_vmem [thread:$0]  %s1, 3456, %s156, [#allocation6], 128, 128, 8
        $region16: #{tpu_custom_call.1} parent=11 // pred_fallthru
          _
      $region12: #{tpu_custom_call.1} parent=5 // pred_fallthru
        _
      %p162 = scmp.lt.s32.totalorder %s19, 4
      // Predicated region
      $region17: #{tpu_custom_call.1} parent=5 // pred_check
        %p163 = pneg %p162
      $region18: #{tpu_custom_call.1} parent=5 // pred_check_branch
        %165 = sbr.rel (%p163) target = $region20
      $region19: #{tpu_custom_call.1} parent=5 // pred_region
        // Predicated region
        $region21: #{tpu_custom_call.1} parent=19 // pred_check
          %p166 = pneg %p39
        $region22: #{tpu_custom_call.1} parent=19 // pred_check_branch
          %168 = sbr.rel (%p166) target = $region24
        $region23: #{tpu_custom_call.1} parent=19 // pred_region
          %s169 = sand.u32 %s29, 1
          %s170 = scalar_lea.sflag [#allocation3], %s169
          %s171 = sand.u32 %s29, 1
          %s172 = smul.addr %s171, 16
          %s173 = scalar_lea.vmem [#allocation2], %s172
          %s175 = ssub.s32 256, 256
          %176 = vsyncadd %s170, %s175
          %s177 = smul.addr %s19, 2
          %s178 = smul.addr %s177, 128
          %s179 = scalar_lea.hbm %s0, %s178
          %s181 = sshll.u32 %s173, 4
          %s182 = int_to_ptr.vmem [resolvable:$true] %s181
          %184 = dma.hbm_to_vmem [thread:$0]  %s179, 256, %s182, %s170
        $region24: #{tpu_custom_call.1} parent=19 // pred_fallthru
          _
      $region20: #{tpu_custom_call.1} parent=5 // pred_fallthru
        _
      %p185 = scmp.le.s32.totalorder 1, %s19
      %p186 = scmp.lt.s32.totalorder %s19, 5
      %p187 = pnand %p185, %p186
      %p188 = pneg %p187
      // Predicated region
      $region25: #{tpu_custom_call.1} parent=5 // pred_check
        _
      $region26: #{tpu_custom_call.1} parent=5 // pred_check_branch
        %190 = sbr.rel (%p187) target = $region28
      $region27: #{tpu_custom_call.1} parent=5 // pred_region
        %s191 = ssub.s32 %s19, 1
        %s192 = sand.u32 %s32, 1
        %s193 = scalar_lea.sflag [#allocation3], %s192
        %s194 = sand.u32 %s32, 1
        %s195 = smul.addr %s194, 16
        %s196 = scalar_lea.vmem [#allocation2], %s195
        // Predicated region
        $region29: #{tpu_custom_call.1} parent=27 // pred_check
          %p197 = pneg %p45
        $region30: #{tpu_custom_call.1} parent=27 // pred_check_branch
          %199 = sbr.rel (%p197) target = $region32
        $region31: #{tpu_custom_call.1} parent=27 // pred_region
          %200 = dma.done %s193, 256
        $region32: #{tpu_custom_call.1} parent=27 // pred_fallthru
          _
        // Predicated region
        $region33: #{tpu_custom_call.1} parent=27 // pred_check
          %p201 = pneg %p66
        $region34: #{tpu_custom_call.1} parent=27 // pred_check_branch
          %203 = sbr.rel (%p201) target = $region36
        $region35: #{tpu_custom_call.1} parent=27 // pred_region
          %204 = dma.done [#allocation6], 3456
        $region36: #{tpu_custom_call.1} parent=27 // pred_fallthru
          _
        %s205 = sand.u32 %s32, 1
        %s206 = scalar_lea.sflag [#allocation3], %s205
        %s207 = sand.u32 %s32, 1
        %s208 = smul.addr %s207, 16
        %s209 = scalar_lea.vmem [#allocation2], %s208
        %p210 = pneg %p45
        %p211 = pneg %p42
        %p212 = pneg %p66
        %p213 = pneg %p63
        %p214 = pneg %p92
        %p215 = pneg %p89
        %s216 = sand.u32 %s79, 1
        %s217 = scalar_lea.sflag [#allocation4], %s216
        %s218 = sand.u32 %s79, 1
        %s219 = smul.addr %s218, 8
        %s220 = scalar_lea.vmem [#allocation7], %s219
        %p221 = pneg %p113
        %p222 = pneg %p110
        %p223 = pneg %p134
        %p224 = pneg %p131
        %p225 = scmp.eq.s32.totalorder %s24, 0
        // Predicated region
        $region37: #{tpu_custom_call.1} parent=27 // pred_check
          %p226 = pneg %p225
        $region38: #{tpu_custom_call.1} parent=27 // pred_check_branch
          %228 = sbr.rel (%p226) target = $region40
        $region39: #{tpu_custom_call.1} parent=27 // pred_region
          %229 = vst [vmem:[#allocation8] sm:$0x1] 0.0
          %230 = vst [vmem:[#allocation10] sm:$0x1] 0.0
        $region40: #{tpu_custom_call.1} parent=27 // pred_fallthru
          _
        %v231 = vld [vmem:[%s196] sm:$0xff]
        %v232 = vld [vmem:[%s196 + $0x8] sm:$0xff]
        %v233 = vld [vmem:[#allocation5] sm:$0xff]
        %v234 = vld [vmem:[#allocation5 + $0x8] sm:$0xff]
        %v235 = vld [vmem:[#allocation5 + $0x10] sm:$0xff]
        %v236 = vld [vmem:[#allocation5 + $0x18] sm:$0xff]
        %v237 = vld [vmem:[#allocation5 + $0x20] sm:$0xff]
        %v238 = vld [vmem:[#allocation5 + $0x28] sm:$0xff]
        %v239 = vld [vmem:[#allocation5 + $0x30] sm:$0xff]
        %v240 = vld [vmem:[#allocation5 + $0x38] sm:$0xff]
        %v241 = vld [vmem:[#allocation5 + $0x40] sm:$0xff]
        %v242 = vld [vmem:[#allocation5 + $0x48] sm:$0xff]
        %v243 = vld [vmem:[#allocation5 + $0x50] sm:$0xff]
        %v244 = vld [vmem:[#allocation5 + $0x58] sm:$0xff]
        %v245 = vld [vmem:[#allocation5 + $0x60] sm:$0xff]
        %v246 = vld [vmem:[#allocation5 + $0x68] sm:$0xff]
        %v247 = vld [vmem:[#allocation5 + $0x70] sm:$0xff]
        %v248 = vld [vmem:[#allocation5 + $0x78] sm:$0xff]
        %v249 = vld [vmem:[#allocation5 + $0x80] sm:$0xff]
        %v250 = vld [vmem:[#allocation5 + $0x88] sm:$0xff]
        %v251 = vld [vmem:[#allocation5 + $0x90] sm:$0xff]
        %v252 = vld [vmem:[#allocation5 + $0x98] sm:$0xff]
        %v253 = vld [vmem:[#allocation5 + $0xa0] sm:$0xff]
        %v254 = vld [vmem:[#allocation5 + $0xa8] sm:$0xff]
        %v255 = vld [vmem:[#allocation5 + $0xb0] sm:$0xff]
        %v256 = vld [vmem:[#allocation5 + $0xb8] sm:$0xff]
        %v257 = vld [vmem:[#allocation5 + $0xc0] sm:$0xff]
        %v258 = vld [vmem:[#allocation5 + $0xc8] sm:$0xff]
        %v259 = vld [vmem:[#allocation5 + $0xd0] sm:$0xff]
        %vm260 = vcmask 719872
        %v262 = vsel %vm260, %v232, 0
        %264 = vmatprep.subr.mxu0 0.0
        %265 = vmatpush1.msra.mxu0 %v233
        %266 = vmatprep.subr.mxu0 0.0
        %267 = vmatpush1.msra.mxu0 %v234
        %268 = vmatprep.subr.mxu0 0.0
        %269 = vmatpush1.msra.mxu0 %v235
        %270 = vmatprep.subr.mxu0 0.0
        %271 = vmatpush1.msra.mxu0 %v236
        %272 = vmatprep.subr.mxu0 0.0
        %273 = vmatpush1.msra.mxu0 %v237
        %274 = vmatprep.subr.mxu0 0.0
        %275 = vmatpush1.msra.mxu0 %v238
        %276 = vmatprep.subr.mxu0 0.0
        %277 = vmatpush1.msra.mxu0 %v239
        %278 = vmatprep.subr.mxu0 0.0
        %279 = vmatpush1.msra.mxu0 %v240
        %280 = vmatprep.subr.mxu0 0.0
        %281 = vmatpush1.msra.mxu0 %v241
        %282 = vmatprep.subr.mxu0 0.0
        %283 = vmatpush1.msra.mxu0 %v242
        %284 = vmatprep.subr.mxu0 0.0
        %285 = vmatpush1.msra.mxu0 %v243
        %286 = vmatprep.subr.mxu0 0.0
        %287 = vmatpush1.msra.mxu0 %v244
        %288 = vmatprep.subr.mxu0 0.0
        %289 = vmatpush1.msra.mxu0 %v245
        %290 = vmatprep.subr.mxu0 0.0
        %291 = vmatpush1.msra.mxu0 %v246
        %292 = vmatprep.subr.mxu0 0.0
        %293 = vmatpush1.msra.mxu0 %v247
        %294 = vmatprep.subr.mxu0 0.0
        %295 = vmatpush1.msra.mxu0 %v248
        %296 = vmatprep.subr.mxu0 0.0
        %297 = vmatpush1.msra.mxu0 %v249
        %298 = vmatprep.subr.mxu0 0.0
        %299 = vmatpush1.msra.mxu0 %v250
        %300 = vmatprep.subr.mxu0 0.0
        %301 = vmatpush1.msra.mxu0 %v251
        %302 = vmatprep.subr.mxu0 0.0
        %303 = vmatpush1.msra.mxu0 %v252
        %304 = vmatprep.subr.mxu0 0.0
        %305 = vmatpush1.msra.mxu0 %v253
        %306 = vmatprep.subr.mxu0 0.0
        %307 = vmatpush1.msra.mxu0 %v254
        %308 = vmatprep.subr.mxu0 0.0
        %309 = vmatpush1.msra.mxu0 %v255
        %310 = vmatprep.subr.mxu0 0.0
        %311 = vmatpush1.msra.mxu0 %v256
        %312 = vmatprep.subr.mxu0 0.0
        %313 = vmatpush1.msra.mxu0 %v257
        %314 = vmatprep.subr.mxu0 0.0
        %315 = vmatpush1.msra.mxu0 %v258
        %316 = vmatprep.subr.mxu0 0.0
        %317 = vmatpush1.msra.mxu0 %v259
        %318 = vmatprep.subr.mxu0 0.0
        %319 = vmatpush1.msra.mxu0 0.0
        %320 = vmatprep.subr.mxu0 0.0
        %321 = vmatpush1.msra.mxu0 0.0
        %322 = vmatprep.subr.mxu0 0.0
        %323 = vmatpush1.msra.mxu0 0.0
        %324 = vmatprep.subr.mxu0 0.0
        %325 = vmatpush1.msra.mxu0 0.0
        %326 = vmatprep.subr.mxu0 0.0
        %327 = vmatpush1.msra.mxu0 0.0
        %328 = vmatprep.mubr.f32.mxu0 %v262
        %329 = vmatmul.mubr.f32.gmra.mrb[0].mxu0 %v231
        %v330 = vpop.f32.mrb[0].mxu0
        %v331 = vadd.f32 0.0, %v330
        %v332 = vpop.f32.mrb[0].mxu0
        %333 = vdwg.mxu0
        %334 = vst [vmem:[%s220] sm:$0xff] %v331
        %v335 = vld [vmem:[#allocation8] sm:$0x1]
        %v336 = vrot.slane %v331, 4
        %v337 = vadd.f32 %v331, %v336
        %v338 = vrot.slane %v337, 2
        %v339 = vadd.f32 %v337, %v338
        %v340 = vrot.slane %v339, 1
        %v341 = vadd.f32 %v339, %v340
        %v342 = vadd.f32 %v335, %v341
        %343 = vst [vmem:[#allocation8] sm:$0x1] %v342
        %v344 = vld [vmem:[#allocation10] sm:$0x1]
        %v345 = vmul.f32 %v331, %v331
        %v346 = vrot.slane %v345, 4
        %v347 = vadd.f32 %v345, %v346
        %v348 = vrot.slane %v347, 2
        %v349 = vadd.f32 %v347, %v348
        %v350 = vrot.slane %v349, 1
        %v351 = vadd.f32 %v349, %v350
        %v352 = vadd.f32 %v344, %v351
        %353 = vst [vmem:[#allocation10] sm:$0x1] %v352
        %s354 = sand.u32 %s79, 1
        %s355 = scalar_lea.sflag [#allocation4], %s354
        %s356 = sand.u32 %s79, 1
        %s357 = smul.addr %s356, 8
        %s358 = scalar_lea.vmem [#allocation7], %s357
        // Predicated region
        $region41: #{tpu_custom_call.1} parent=27 // pred_check
          %p359 = pneg %p89
        $region42: #{tpu_custom_call.1} parent=27 // pred_check_branch
          %361 = sbr.rel (%p359) target = $region44
        $region43: #{tpu_custom_call.1} parent=27 // pred_region
          %s363 = ssub.s32 128, 128
          %364 = vsyncadd %s355, %s363
          %s365 = smul.addr %s24, 128
          %s366 = scalar_lea.hbm %s2, %s365
          %s368 = sshll.u32 %s358, 4
          %s369 = int_to_ptr.vmem [resolvable:$true] %s368
          %371 = dma.vmem_to_hbm [thread:$0]  %s369, 128, %s366, %s355
        $region44: #{tpu_custom_call.1} parent=27 // pred_fallthru
          _
        // Predicated region
        $region45: #{tpu_custom_call.1} parent=27 // pred_check
          %p372 = pneg %p110
        $region46: #{tpu_custom_call.1} parent=27 // pred_check_branch
          %374 = sbr.rel (%p372) target = $region48
        $region47: #{tpu_custom_call.1} parent=27 // pred_region
          %s376 = ssub.s32 16, 16
          %377 = vsyncadd [#allocation9], %s376
          %s379 = sshll.u32 [#allocation8], 4
          %s380 = int_to_ptr.vmem [resolvable:$true] %s379
          %382 = dma.vmem_to_hbm [thread:$0]  %s380, 16, %s3, [#allocation9]
        $region48: #{tpu_custom_call.1} parent=27 // pred_fallthru
          _
        // Predicated region
        $region49: #{tpu_custom_call.1} parent=27 // pred_check
          %p383 = pneg %p131
        $region50: #{tpu_custom_call.1} parent=27 // pred_check_branch
          %385 = sbr.rel (%p383) target = $region52
        $region51: #{tpu_custom_call.1} parent=27 // pred_region
          %s387 = ssub.s32 16, 16
          %388 = vsyncadd [#allocation9], %s387
          %s390 = sshll.u32 [#allocation10], 4
          %s391 = int_to_ptr.vmem [resolvable:$true] %s390
          %393 = dma.vmem_to_hbm [thread:$0]  %s391, 16, %s4, [#allocation9]
        $region52: #{tpu_custom_call.1} parent=27 // pred_fallthru
          _
        // Predicated region
        $region53: #{tpu_custom_call.1} parent=27 // pred_check
          %p394 = pneg %p110
        $region54: #{tpu_custom_call.1} parent=27 // pred_check_branch
          %396 = sbr.rel (%p394) target = $region56
        $region55: #{tpu_custom_call.1} parent=27 // pred_region
          %397 = dma.done [#allocation9], 16
        $region56: #{tpu_custom_call.1} parent=27 // pred_fallthru
          _
        // Predicated region
        $region57: #{tpu_custom_call.1} parent=27 // pred_check
          %p398 = pneg %p131
        $region58: #{tpu_custom_call.1} parent=27 // pred_check_branch
          %400 = sbr.rel (%p398) target = $region60
        $region59: #{tpu_custom_call.1} parent=27 // pred_region
          %401 = dma.done [#allocation9], 16
        $region60: #{tpu_custom_call.1} parent=27 // pred_fallthru
          _
      $region28: #{tpu_custom_call.1} parent=5 // pred_fallthru
        _
      %p402 = scmp.le.s32.totalorder 2, %s19
      // Predicated region
      $region61: #{tpu_custom_call.1} parent=5 // pred_check
        %p403 = pneg %p402
      $region62: #{tpu_custom_call.1} parent=5 // pred_check_branch
        %405 = sbr.rel (%p403) target = $region64
      $region63: #{tpu_custom_call.1} parent=5 // pred_region
        %s406 = ssub.s32 %s19, 2
        // Predicated region
        $region65: #{tpu_custom_call.1} parent=63 // pred_check
          %p407 = pneg %p95
        $region66: #{tpu_custom_call.1} parent=63 // pred_check_branch
          %409 = sbr.rel (%p407) target = $region68
        $region67: #{tpu_custom_call.1} parent=63 // pred_region
          %s410 = sand.u32 %s80, 1
          %s411 = scalar_lea.sflag [#allocation4], %s410
          %s412 = sand.u32 %s80, 1
          %s413 = smul.addr %s412, 8
          %s414 = scalar_lea.vmem [#allocation7], %s413
          %415 = dma.done %s411, 128
        $region68: #{tpu_custom_call.1} parent=63 // pred_fallthru
          _
      $region64: #{tpu_custom_call.1} parent=5 // pred_fallthru
        _
    $region6: #{tpu_custom_call.1} parent=1 // loop_footer
      %s23 = sadd.s32 1, %s19
    $region7: #{tpu_custom_call.1} parent=1 // loop_footer_branch
      %18 = sbr.rel target = $region3
    $region8: #{tpu_custom_call.1} parent=1 // loop_exit
      _
    %416 = vsyncpa [#allocation3], 1
    %s417 = scalar_lea.sflag [#allocation3], 1
    %418 = vsyncpa %s417, 1
    %419 = vsyncpa [#allocation6], 1
    %420 = vsyncpa [#allocation4], 1
    %s421 = scalar_lea.sflag [#allocation4], 1
    %422 = vsyncpa %s421, 1
    %423 = vsyncpa [#allocation9], 1

</llo_original>
